<compile_context>
chip_gen: v6e
topology: v6e:2x2x1
jax: 0.10.0
libtpu: 0.0.40
codegen_flags: <defaults>
</compile_context>

<pallas_src>
import numpy as np
import jax
import jax.numpy as jnp
from jax.experimental import pallas as pl
from jax.experimental.pallas import tpu as pltpu

# ---- small, module-consistent sizes ----------------------------------------
BATCH = 4
LATENT_DIM = 32
HIDDEN_DIM = 64
N_LAYERS = 3
N_NODES = 8
N_EDGES = N_NODES * (N_NODES - 1) // 2          # 28
TAU = 1.0                                       # > 0, never changes the sign decision

N_HIDDEN = N_LAYERS - 1                         # hidden Linear+ReLU layers
B_PAD = 8                                       # f32 sublane multiple
ADJ_FLAT = N_NODES * N_NODES                    # 64
OUT_PAD = 128                                   # lane-dense output width


# ---- Pallas kernel -----------------------------------------------------------
def make_decoder_kernel(n_hidden):
    """x_pad, Wh_stack, bh_stack, W_diff, (gumbel_diff + bias_diff), scatter -> adj_flat."""

    def kernel(x_ref, wh_ref, bh_ref, wd_ref, gb_ref, s_ref, out_ref):
        h = x_ref[...]                                   # (B_PAD, H)
        for l in range(n_hidden):                        # static unroll (tiny, fixed)
            h = jnp.maximum(
                jnp.dot(h, wh_ref[l], preferred_element_type=jnp.float32)
                + bh_ref[l], 0.0)

        # fused final layer: d = h @ (W0 - W1)^T + (b0 - b1) + (g0 - g1)
        d = jnp.dot(h, wd_ref[...], preferred_element_type=jnp.float32) + gb_ref[...]

        # hard gumbel-softmax, component-0 selection (tie -> first index, like torch)
        edges = (d >= 0.0).astype(jnp.float32)           # (B_PAD, N_EDGES)

        # static triu scatter + symmetrization as a 0/1 matmul (exact in f32)
        out_ref[...] = jnp.dot(edges, s_ref[...],
                               preferred_element_type=jnp.float32)

    return kernel


# ---- one-time parameter preprocessing (hoisted out of the hot path) ----------
def prepare_decoder_params(weights, biases):
    """PyTorch-layout (out,in)/(out,) params -> packed kernel operands."""
    wh, bh = [], []
    for w, b in zip(weights[:-1], biases[:-1]):
        wt = jnp.transpose(w).astype(jnp.float32)        # (in, out)
        if wt.shape[0] < HIDDEN_DIM:                     # zero-pad latent dim -> H
            wt = jnp.pad(wt, ((0, HIDDEN_DIM - wt.shape[0]), (0, 0)))
        wh.append(wt)
        bh.append(b.reshape(1, HIDDEN_DIM).astype(jnp.float32))
    wh = jnp.stack(wh)                                   # (n_hidden, H, H)
    bh = jnp.stack(bh)                                   # (n_hidden, 1, H)

    w_last, b_last = weights[-1], biases[-1]
    # PyTorch reshape (B, 2E) -> (B, E, 2): row 2e is comp-0, row 2e+1 is comp-1
    w_diff = jnp.transpose(w_last[0::2, :] - w_last[1::2, :]).astype(jnp.float32)
    b_diff = (b_last[0::2] - b_last[1::2]).reshape(1, N_EDGES).astype(jnp.float32)
    return wh, bh, w_diff, b_diff


def make_scatter_matrix():
    """(N_EDGES, OUT_PAD) 0/1 matrix mapping edge e -> adj[i,j] and adj[j,i]."""
    s = np.zeros((N_EDGES, OUT_PAD), np.float32)
    iu0, iu1 = np.triu_indices(N_NODES, k=1)             # same order as torch.triu_indices
    for e, (i, j) in enumerate(zip(iu0, iu1)):
        s[e, i * N_NODES + j] = 1.0
        s[e, j * N_NODES + i] = 1.0
    return jnp.asarray(s)


# ---- forward: single pallas_call + cheap pad/slice glue -----------------------
def decoder_forward(x, gumbel, wh, bh, w_diff, b_diff, scatter):
    B = x.shape[0]
    x_pad = jnp.zeros((B_PAD, HIDDEN_DIM), jnp.float32).at[:B, :LATENT_DIM].set(x)
    gb = jnp.zeros((B_PAD, N_EDGES), jnp.float32).at[:B, :].set(
        (gumbel[:, :, 0] - gumbel[:, :, 1]) + b_diff)

    flops = 2 * B_PAD * (N_HIDDEN * HIDDEN_DIM * HIDDEN_DIM
                         + HIDDEN_DIM * N_EDGES + N_EDGES * OUT_PAD)
    bytes_accessed = 4 * (B_PAD * HIDDEN_DIM
                          + N_HIDDEN * HIDDEN_DIM * (HIDDEN_DIM + 1)
                          + HIDDEN_DIM * N_EDGES + B_PAD * N_EDGES
                          + N_EDGES * OUT_PAD + B_PAD * OUT_PAD)

    out = pl.pallas_call(
        make_decoder_kernel(N_HIDDEN),
        out_shape=jax.ShapeDtypeStruct((B_PAD, OUT_PAD), jnp.float32),
        in_specs=[pl.BlockSpec(memory_space=pltpu.MemorySpace.VMEM)] * 6,
        out_specs=pl.BlockSpec(memory_space=pltpu.MemorySpace.VMEM),
        cost_estimate=pl.CostEstimate(flops=flops, transcendentals=0,
                                      bytes_accessed=bytes_accessed),
    )(x_pad, wh, bh, w_diff, gb, scatter)

    return out[:B, :ADJ_FLAT].reshape(B, N_NODES, N_NODES)


decoder_forward_jit = jax.jit(decoder_forward)


# ---- pure-JAX reference (mirrors the PyTorch forward exactly) -----------------
def edges_to_adj_ref(edges):
    B = edges.shape[0]
    iu0, iu1 = jnp.triu_indices(N_NODES, k=1)
    adj = jnp.zeros((B, N_NODES, N_NODES), jnp.float32)
    adj = adj.at[:, iu0, iu1].set(edges)
    return adj + jnp.swapaxes(adj, 1, 2)


def decoder_ref(x, weights, biases, gumbel):
    h = x
    for w, b in zip(weights[:-1], biases[:-1]):
        h = jax.nn.relu(jnp.dot(h, w.T, precision=jax.lax.Precision.HIGHEST) + b)
    logits = jnp.dot(h, weights[-1].T, precision=jax.lax.Precision.HIGHEST) + biases[-1]
    logits = logits.reshape(x.shape[0], -1, 2)
    y = (logits + gumbel) / TAU
    edges = (y[:, :, 0] >= y[:, :, 1]).astype(jnp.float32)
    return edges_to_adj_ref(edges)


# ---- deterministic parameter init (PyTorch nn.Linear default scheme) ----------
def init_params(key):
    dims = [LATENT_DIM] + [HIDDEN_DIM] * (N_LAYERS - 1) + [2 * N_EDGES]
    weights, biases = [], []
    for i in range(N_LAYERS):
        fan_in, fan_out = dims[i], dims[i + 1]
        key, kw, kb = jax.random.split(key, 3)
        bound = 1.0 / float(np.sqrt(fan_in))
        weights.append(
            jax.random.uniform(kw, (fan_out, fan_in), jnp.float32, -bound, bound))
        biases.append(
            jax.random.uniform(kb, (fan_out,), jnp.float32, -bound, bound))
    return weights, biases


if __name__ == "__main__":
    key = jax.random.PRNGKey(0)
    key, kx, kg, kp = jax.random.split(key, 4)

    x = jax.random.normal(kx, (BATCH, LATENT_DIM), jnp.float32)
    # deterministic Gumbel(0,1) noise, one sample per (edge, class) logit
    # TODO(synk): gumbel noise is generated outside the kernel (stochastic op);
    # the kernel consumes it as an input to stay deterministic/testable.
    gumbel = jax.random.gumbel(kg, (BATCH, N_EDGES, 2), jnp.float32)
    weights, biases = init_params(kp)

    # one-time preprocessing (not in the per-call hot path)
    wh, bh, w_diff, b_diff = prepare_decoder_params(weights, biases)
    scatter = make_scatter_matrix()

    adj = decoder_forward_jit(x, gumbel, wh, bh, w_diff, b_diff, scatter)
    adj = jax.block_until_ready(adj)

    adj_ref = jax.block_until_ready(decoder_ref(x, weights, biases, gumbel))

    assert adj.shape == (BATCH, N_NODES, N_NODES)
    assert np.allclose(np.asarray(adj), np.asarray(adj_ref)), "mismatch vs reference"
    # adjacency must be symmetric with zero diagonal
    assert np.allclose(np.asarray(adj), np.asarray(adj).transpose(0, 2, 1))
    assert np.allclose(np.diagonal(np.asarray(adj), axis1=1, axis2=2), 0.0)

    print("KERNEL_OK")
</pallas_src>

<mosaic_0001>
module attributes {stable_mosaic.version = 11 : i64} {
  func.func @kernel(%arg0: memref<8x64xf32, #tpu.memory_space<vmem>>, %arg1: memref<2x64x64xf32, #tpu.memory_space<vmem>>, %arg2: memref<2x1x64xf32, #tpu.memory_space<vmem>>, %arg3: memref<64x28xf32, #tpu.memory_space<vmem>>, %arg4: memref<8x28xf32, #tpu.memory_space<vmem>>, %arg5: memref<28x128xf32, #tpu.memory_space<vmem>>, %arg6: memref<8x128xf32, #tpu.memory_space<vmem>>) attributes {dimension_semantics = [], scalar_prefetch = 0 : i64, scratch_operands = 0 : i64, tpu.core_type = #tpu.core_type<tc>} {
    %c0 = arith.constant 0 : index
    %c0_0 = arith.constant 0 : index
    %0 = vector.load %arg0[%c0, %c0_0] : memref<8x64xf32, #tpu.memory_space<vmem>>, vector<8x64xf32>
    %c0_1 = arith.constant 0 : index
    %c0_2 = arith.constant 0 : index
    %c0_3 = arith.constant 0 : index
    %1 = vector.load %arg1[%c0_1, %c0_2, %c0_3] : memref<2x64x64xf32, #tpu.memory_space<vmem>>, vector<1x64x64xf32>
    %2 = vector.shape_cast %1 : vector<1x64x64xf32> to vector<64x64xf32>
    %cst = arith.constant dense<0.000000e+00> : vector<8x64xf32>
    %3 = tpu.matmul %0, %2, %cst {dimension_numbers = #tpu.dot_dimension_numbers<[1], [0], [0], [1], [0, 0, 1, 1], [], []>} : vector<8x64xf32>, vector<64x64xf32>, vector<8x64xf32> -> vector<8x64xf32>
    %c0_4 = arith.constant 0 : index
    %c0_5 = arith.constant 0 : index
    %c0_6 = arith.constant 0 : index
    %4 = vector.load %arg2[%c0_4, %c0_5, %c0_6] : memref<2x1x64xf32, #tpu.memory_space<vmem>>, vector<1x1x64xf32>
    %5 = vector.shape_cast %4 : vector<1x1x64xf32> to vector<1x64xf32>
    %6 = vector.broadcast %5 : vector<1x64xf32> to vector<8x64xf32>
    %7 = arith.addf %3, %6 : vector<8x64xf32>
    %cst_7 = arith.constant 0.000000e+00 : f32
    %8 = vector.broadcast %cst_7 : f32 to vector<8x64xf32>
    %9 = arith.maximumf %7, %8 : vector<8x64xf32>
    %c1 = arith.constant 1 : index
    %c0_8 = arith.constant 0 : index
    %c0_9 = arith.constant 0 : index
    %10 = vector.load %arg1[%c1, %c0_8, %c0_9] : memref<2x64x64xf32, #tpu.memory_space<vmem>>, vector<1x64x64xf32>
    %11 = vector.shape_cast %10 : vector<1x64x64xf32> to vector<64x64xf32>
    %cst_10 = arith.constant dense<0.000000e+00> : vector<8x64xf32>
    %12 = tpu.matmul %9, %11, %cst_10 {dimension_numbers = #tpu.dot_dimension_numbers<[1], [0], [0], [1], [0, 0, 1, 1], [], []>} : vector<8x64xf32>, vector<64x64xf32>, vector<8x64xf32> -> vector<8x64xf32>
    %c1_11 = arith.constant 1 : index
    %c0_12 = arith.constant 0 : index
    %c0_13 = arith.constant 0 : index
    %13 = vector.load %arg2[%c1_11, %c0_12, %c0_13] : memref<2x1x64xf32, #tpu.memory_space<vmem>>, vector<1x1x64xf32>
    %14 = vector.shape_cast %13 : vector<1x1x64xf32> to vector<1x64xf32>
    %15 = vector.broadcast %14 : vector<1x64xf32> to vector<8x64xf32>
    %16 = arith.addf %12, %15 : vector<8x64xf32>
    %cst_14 = arith.constant 0.000000e+00 : f32
    %17 = vector.broadcast %cst_14 : f32 to vector<8x64xf32>
    %18 = arith.maximumf %16, %17 : vector<8x64xf32>
    %c0_15 = arith.constant 0 : index
    %c0_16 = arith.constant 0 : index
    %19 = vector.load %arg3[%c0_15, %c0_16] : memref<64x28xf32, #tpu.memory_space<vmem>>, vector<64x28xf32>
    %cst_17 = arith.constant dense<0.000000e+00> : vector<8x28xf32>
    %20 = tpu.matmul %18, %19, %cst_17 {dimension_numbers = #tpu.dot_dimension_numbers<[1], [0], [0], [1], [0, 0, 1, 1], [], []>} : vector<8x64xf32>, vector<64x28xf32>, vector<8x28xf32> -> vector<8x28xf32>
    %c0_18 = arith.constant 0 : index
    %c0_19 = arith.constant 0 : index
    %21 = vector.load %arg4[%c0_18, %c0_19] : memref<8x28xf32, #tpu.memory_space<vmem>>, vector<8x28xf32>
    %22 = arith.addf %20, %21 : vector<8x28xf32>
    %cst_20 = arith.constant 0.000000e+00 : f32
    %23 = vector.broadcast %cst_20 : f32 to vector<8x28xf32>
    %24 = arith.cmpf oge, %22, %23 : vector<8x28xf32>
    %25 = arith.extui %24 : vector<8x28xi1> to vector<8x28xi32>
    %26 = arith.sitofp %25 : vector<8x28xi32> to vector<8x28xf32>
    %c0_21 = arith.constant 0 : index
    %c0_22 = arith.constant 0 : index
    %27 = vector.load %arg5[%c0_21, %c0_22] : memref<28x128xf32, #tpu.memory_space<vmem>>, vector<28x128xf32>
    %cst_23 = arith.constant dense<0.000000e+00> : vector<8x128xf32>
    %28 = tpu.matmul %26, %27, %cst_23 {dimension_numbers = #tpu.dot_dimension_numbers<[1], [0], [0], [1], [0, 0, 1, 1], [], []>} : vector<8x28xf32>, vector<28x128xf32>, vector<8x128xf32> -> vector<8x128xf32>
    %c0_24 = arith.constant 0 : index
    %c0_25 = arith.constant 0 : index
    %29 = vector.load %arg6[%c0_24, %c0_25] : memref<8x128xf32, #tpu.memory_space<vmem>>, vector<8x128xf32>
    tpu.vector_store %arg6[%c0_24, %c0_25], %28 {strides = array<i32>} : memref<8x128xf32, #tpu.memory_space<vmem>>, vector<8x128xf32>,
    return
  }
}

</mosaic_0001>

<llo_original>
// kernel: decoder_forward.1
$region0: #{decoder_forward.1}
  #allocation0 [shape = 'u32[]', space=smem, size = 0x4, offset = 0x4, fixed_abs, tag = 'smem constant byte address 0x4 - core index']
  #allocation1 [shape = 'u32[144,128]{1,0:T(1,128)}', space=vmem, size = 0x12000, scoped, tag = 'internal scratch']
  %s0 = inlined_call_operand.vmem [shape: f32[8,64], index: 0, kind: input, shape index: {}]
  %s1 = inlined_call_operand.vmem [shape: f32[2,64,64], index: 1, kind: input, shape index: {}]
  %s2 = inlined_call_operand.vmem [shape: f32[2,1,64], index: 2, kind: input, shape index: {}]
  %s3 = inlined_call_operand.vmem [shape: f32[64,28], index: 3, kind: input, shape index: {}]
  %s4 = inlined_call_operand.vmem [shape: f32[8,28], index: 4, kind: input, shape index: {}]
  %s5 = inlined_call_operand.hbm [shape: f32[28,128], index: 5, kind: input, shape index: {}]
  %s6 = inlined_call_operand.vmem [shape: f32[8,128], index: 6, kind: output, shape index: {}]
  %s7 = sld [smem:[#allocation0]]
  $region38: #{decoder_forward.1} parent=0
    _
  %s9 = ssub.s32 1, %s7
  %s10 = scalar_select 0, %s9, %s7
  $region1: #{decoder_forward.1} parent=0
    #allocation2 [shape = 'u8[16384]{0}', space=vmem, size = 0x4000, scoped, tag = 'input window, operand 5, single buffered']
    #allocation3 [shape = 's32[1]{0}', space=sflag, size = 0x4, scoped, tag = 'scoped memory for decoder_forward.1']
    %11 = vsyncpa [#allocation3], 0
    // Predicated region
    $region2: #{decoder_forward.1} parent=1 // pred_check
      _
    $region3: #{decoder_forward.1} parent=1 // pred_check_branch
      %13 = sbr.rel (0) target = $region5
    $region4: #{decoder_forward.1} parent=1 // pred_region
      _
    $region5: #{decoder_forward.1} parent=1 // pred_fallthru
      _
    // Predicated region
    $region6: #{decoder_forward.1} parent=1 // pred_check
      _
    $region7: #{decoder_forward.1} parent=1 // pred_check_branch
      %15 = sbr.rel (0) target = $region9
    $region8: #{decoder_forward.1} parent=1 // pred_region
      _
    $region9: #{decoder_forward.1} parent=1 // pred_fallthru
      _
    // Predicated region
    $region10: #{decoder_forward.1} parent=1 // pred_check
      _
    $region11: #{decoder_forward.1} parent=1 // pred_check_branch
      %17 = sbr.rel (0) target = $region13
    $region12: #{decoder_forward.1} parent=1 // pred_region
      _
    $region13: #{decoder_forward.1} parent=1 // pred_fallthru
      _
    // Predicated region
    $region14: #{decoder_forward.1} parent=1 // pred_check
      _
    $region15: #{decoder_forward.1} parent=1 // pred_check_branch
      %19 = sbr.rel (0) target = $region17
    $region16: #{decoder_forward.1} parent=1 // pred_region
      _
    $region17: #{decoder_forward.1} parent=1 // pred_fallthru
      _
    // Predicated region
    $region18: #{decoder_forward.1} parent=1 // pred_check
      _
    $region19: #{decoder_forward.1} parent=1 // pred_check_branch
      %21 = sbr.rel (0) target = $region21
    $region20: #{decoder_forward.1} parent=1 // pred_region
      _
    $region21: #{decoder_forward.1} parent=1 // pred_fallthru
      _
    // Predicated region
    $region22: #{decoder_forward.1} parent=1 // pred_check
      _
    $region23: #{decoder_forward.1} parent=1 // pred_check_branch
      %23 = sbr.rel (0) target = $region25
    $region24: #{decoder_forward.1} parent=1 // pred_region
      %s25 = ssub.s32 512, 512
      %26 = vsyncadd [#allocation3], %s25
      %s27 = sshll.u32 [#allocation2], 4
      %s28 = int_to_ptr.vmem [resolvable:$true] %s27
      %33 = dma.hbm_to_vmem [thread:$0]  %s5, 512, %s28, [#allocation3], 128, 128, 8
    $region25: #{decoder_forward.1} parent=1 // pred_fallthru
      _
    // Predicated region
    $region26: #{decoder_forward.1} parent=1 // pred_check
      _
    $region27: #{decoder_forward.1} parent=1 // pred_check_branch
      %35 = sbr.rel (0) target = $region29
    $region28: #{decoder_forward.1} parent=1 // pred_region
      %36 = dma.done [#allocation3], 512
    $region29: #{decoder_forward.1} parent=1 // pred_fallthru
      _
    %v37 = vld [vmem:[%s0] sm:$0xff]
    %v38 = vld [vmem:[%s1] sm:$0xff]
    %v39 = vld [vmem:[%s1 + $0x8] sm:$0xff]
    %v40 = vld [vmem:[%s1 + $0x10] sm:$0xff]
    %v41 = vld [vmem:[%s1 + $0x18] sm:$0xff]
    %v42 = vld [vmem:[%s1 + $0x20] sm:$0xff]
    %v43 = vld [vmem:[%s1 + $0x28] sm:$0xff]
    %v44 = vld [vmem:[%s1 + $0x30] sm:$0xff]
    %v45 = vld [vmem:[%s1 + $0x38] sm:$0xff]
    %v46 = vld [vmem:[%s2] sm:$0x1]
    %v48 = vlaneseq
    %v49 = vshrl.u32 %v48, 7
    %v50 = vsub.s32 0, %v49
    %v51 = vrot.slane %v46, %v50
    %vm53 = vcmask 523264
    %v55 = vsel %vm53, %v37, 0
    %57 = vmatprep.subr.mxu0 0.0
    %58 = vmatpush1.msra.mxu0 0.0
    %59 = vmatprep.subr.mxu0 0.0
    %60 = vmatpush1.msra.mxu0 0.0
    %61 = vmatprep.subr.mxu0 0.0
    %62 = vmatpush1.msra.mxu0 0.0
    %63 = vmatprep.subr.mxu0 0.0
    %64 = vmatpush1.msra.mxu0 0.0
    %65 = vmatprep.subr.mxu0 0.0
    %66 = vmatpush1.msra.mxu0 0.0
    %67 = vmatprep.subr.mxu0 0.0
    %68 = vmatpush1.msra.mxu0 0.0
    %69 = vmatprep.subr.mxu0 0.0
    %70 = vmatpush1.msra.mxu0 0.0
    %71 = vmatprep.subr.mxu0 0.0
    %72 = vmatpush1.msra.mxu0 0.0
    %73 = vmatprep.subr.mxu0 0.0
    %74 = vmatpush1.msra.mxu0 %v45
    %75 = vmatprep.subr.mxu0 0.0
    %76 = vmatpush1.msra.mxu0 %v44
    %77 = vmatprep.subr.mxu0 0.0
    %78 = vmatpush1.msra.mxu0 %v43
    %79 = vmatprep.subr.mxu0 0.0
    %80 = vmatpush1.msra.mxu0 %v42
    %81 = vmatprep.subr.mxu0 0.0
    %82 = vmatpush1.msra.mxu0 %v41
    %83 = vmatprep.subr.mxu0 0.0
    %84 = vmatpush1.msra.mxu0 %v40
    %85 = vmatprep.subr.mxu0 0.0
    %86 = vmatpush1.msra.mxu0 %v39
    %87 = vmatprep.subr.mxu0 0.0
    %88 = vmatpush1.msra.mxu0 %v38
    %89 = vmatprep.subr.mxu0 0.0
    %90 = vmatpush2.msra.mxu0 0.0
    %91 = vmatprep.subr.mxu0 0.0
    %92 = vmatpush2.msra.mxu0 0.0
    %93 = vmatprep.subr.mxu0 0.0
    %94 = vmatpush2.msra.mxu0 0.0
    %95 = vmatprep.subr.mxu0 0.0
    %96 = vmatpush2.msra.mxu0 0.0
    %97 = vmatprep.subr.mxu0 0.0
    %98 = vmatpush2.msra.mxu0 0.0
    %99 = vmatprep.subr.mxu0 0.0
    %100 = vmatpush2.msra.mxu0 0.0
    %101 = vmatprep.subr.mxu0 0.0
    %102 = vmatpush2.msra.mxu0 0.0
    %103 = vmatprep.subr.mxu0 0.0
    %104 = vmatpush2.msra.mxu0 0.0
    %105 = vmatprep.subr.mxu0 0.0
    %106 = vmatpush2.msra.mxu0 0.0
    %107 = vmatprep.subr.mxu0 0.0
    %108 = vmatpush2.msra.mxu0 0.0
    %109 = vmatprep.subr.mxu0 0.0
    %110 = vmatpush2.msra.mxu0 0.0
    %111 = vmatprep.subr.mxu0 0.0
    %112 = vmatpush2.msra.mxu0 0.0
    %113 = vmatprep.subr.mxu0 0.0
    %114 = vmatpush2.msra.mxu0 0.0
    %115 = vmatprep.subr.mxu0 0.0
    %116 = vmatpush2.msra.mxu0 0.0
    %117 = vmatprep.subr.mxu0 0.0
    %118 = vmatpush2.msra.mxu0 0.0
    %119 = vmatprep.subr.mxu0 0.0
    %120 = vmatpush2.msra.mxu0 0.0
    %121 = vmatprep.mubr.f32.mxu0 0.0
    %122 = vmatmul.mubr.f32.gmra.mxu0 %v55
    %v123 = vpop.f32.mrf.mxu0
    %v124 = vadd.f32 %v51, %v123
    %v125 = vpop.f32.mrf.mxu0
    %126 = vdwg.mxu0
    %v127 = vmax.f32 %v124, 0.0
    %s128 = scalar_lea.vmem %s1, 64
    %v129 = vld [vmem:[%s128] sm:$0xff]
    %v130 = vld [vmem:[%s128 + $0x8] sm:$0xff]
    %v131 = vld [vmem:[%s128 + $0x10] sm:$0xff]
    %v132 = vld [vmem:[%s128 + $0x18] sm:$0xff]
    %v133 = vld [vmem:[%s128 + $0x20] sm:$0xff]
    %v134 = vld [vmem:[%s128 + $0x28] sm:$0xff]
    %v135 = vld [vmem:[%s128 + $0x30] sm:$0xff]
    %v136 = vld [vmem:[%s128 + $0x38] sm:$0xff]
    %s137 = scalar_lea.vmem %s2, 1
    %v138 = vld [vmem:[%s137] sm:$0x1]
    %v140 = vlaneseq
    %v141 = vshrl.u32 %v140, 7
    %v142 = vsub.s32 0, %v141
    %v143 = vrot.slane %v138, %v142
    %v146 = vsel %vm53, %v127, 0
    %148 = vmatprep.subr.mxu0 0.0
    %149 = vmatpush1.msra.mxu0 0.0
    %150 = vmatprep.subr.mxu0 0.0
    %151 = vmatpush1.msra.mxu0 0.0
    %152 = vmatprep.subr.mxu0 0.0
    %153 = vmatpush1.msra.mxu0 0.0
    %154 = vmatprep.subr.mxu0 0.0
    %155 = vmatpush1.msra.mxu0 0.0
    %156 = vmatprep.subr.mxu0 0.0
    %157 = vmatpush1.msra.mxu0 0.0
    %158 = vmatprep.subr.mxu0 0.0
    %159 = vmatpush1.msra.mxu0 0.0
    %160 = vmatprep.subr.mxu0 0.0
    %161 = vmatpush1.msra.mxu0 0.0
    %162 = vmatprep.subr.mxu0 0.0
    %163 = vmatpush1.msra.mxu0 0.0
    %164 = vmatprep.subr.mxu0 0.0
    %165 = vmatpush1.msra.mxu0 %v136
    %166 = vmatprep.subr.mxu0 0.0
    %167 = vmatpush1.msra.mxu0 %v135
    %168 = vmatprep.subr.mxu0 0.0
    %169 = vmatpush1.msra.mxu0 %v134
    %170 = vmatprep.subr.mxu0 0.0
    %171 = vmatpush1.msra.mxu0 %v133
    %172 = vmatprep.subr.mxu0 0.0
    %173 = vmatpush1.msra.mxu0 %v132
    %174 = vmatprep.subr.mxu0 0.0
    %175 = vmatpush1.msra.mxu0 %v131
    %176 = vmatprep.subr.mxu0 0.0
    %177 = vmatpush1.msra.mxu0 %v130
    %178 = vmatprep.subr.mxu0 0.0
    %179 = vmatpush1.msra.mxu0 %v129
    %180 = vmatprep.subr.mxu0 0.0
    %181 = vmatpush2.msra.mxu0 0.0
    %182 = vmatprep.subr.mxu0 0.0
    %183 = vmatpush2.msra.mxu0 0.0
    %184 = vmatprep.subr.mxu0 0.0
    %185 = vmatpush2.msra.mxu0 0.0
    %186 = vmatprep.subr.mxu0 0.0
    %187 = vmatpush2.msra.mxu0 0.0
    %188 = vmatprep.subr.mxu0 0.0
    %189 = vmatpush2.msra.mxu0 0.0
    %190 = vmatprep.subr.mxu0 0.0
    %191 = vmatpush2.msra.mxu0 0.0
    %192 = vmatprep.subr.mxu0 0.0
    %193 = vmatpush2.msra.mxu0 0.0
    %194 = vmatprep.subr.mxu0 0.0
    %195 = vmatpush2.msra.mxu0 0.0
    %196 = vmatprep.subr.mxu0 0.0
    %197 = vmatpush2.msra.mxu0 0.0
    %198 = vmatprep.subr.mxu0 0.0
    %199 = vmatpush2.msra.mxu0 0.0
    %200 = vmatprep.subr.mxu0 0.0
    %201 = vmatpush2.msra.mxu0 0.0
    %202 = vmatprep.subr.mxu0 0.0
    %203 = vmatpush2.msra.mxu0 0.0
    %204 = vmatprep.subr.mxu0 0.0
    %205 = vmatpush2.msra.mxu0 0.0
    %206 = vmatprep.subr.mxu0 0.0
    %207 = vmatpush2.msra.mxu0 0.0
    %208 = vmatprep.subr.mxu0 0.0
    %209 = vmatpush2.msra.mxu0 0.0
    %210 = vmatprep.subr.mxu0 0.0
    %211 = vmatpush2.msra.mxu0 0.0
    %212 = vmatprep.mubr.f32.mxu0 0.0
    %213 = vmatmul.mubr.f32.gmra.mxu0 %v146
    %v214 = vpop.f32.mrf.mxu0
    %v215 = vadd.f32 %v143, %v214
    %v216 = vpop.f32.mrf.mxu0
    %217 = vdwg.mxu0
    %v218 = vmax.f32 %v215, 0.0
    %v219 = vld [vmem:[%s3] sm:$0xff]
    %v220 = vld [vmem:[%s3 + $0x8] sm:$0xff]
    %v221 = vld [vmem:[%s3 + $0x10] sm:$0xff]
    %v222 = vld [vmem:[%s3 + $0x18] sm:$0xff]
    %v223 = vld [vmem:[%s3 + $0x20] sm:$0xff]
    %v224 = vld [vmem:[%s3 + $0x28] sm:$0xff]
    %v225 = vld [vmem:[%s3 + $0x30] sm:$0xff]
    %v226 = vld [vmem:[%s3 + $0x38] sm:$0xff]
    %v227 = vld [vmem:[%s4] sm:$0xff]
    %v229 = vsel %vm53, %v218, 0
    %231 = vmatprep.subr.mxu0 0.0
    %232 = vmatpush1.msra.mxu0 0.0
    %233 = vmatprep.subr.mxu0 0.0
    %234 = vmatpush1.msra.mxu0 0.0
    %235 = vmatprep.subr.mxu0 0.0
    %236 = vmatpush1.msra.mxu0 0.0
    %237 = vmatprep.subr.mxu0 0.0
    %238 = vmatpush1.msra.mxu0 0.0
    %239 = vmatprep.subr.mxu0 0.0
    %240 = vmatpush1.msra.mxu0 0.0
    %241 = vmatprep.subr.mxu0 0.0
    %242 = vmatpush1.msra.mxu0 0.0
    %243 = vmatprep.subr.mxu0 0.0
    %244 = vmatpush1.msra.mxu0 0.0
    %245 = vmatprep.subr.mxu0 0.0
    %246 = vmatpush1.msra.mxu0 0.0
    %247 = vmatprep.subr.mxu0 0.0
    %248 = vmatpush1.msra.mxu0 %v226
    %249 = vmatprep.subr.mxu0 0.0
    %250 = vmatpush1.msra.mxu0 %v225
    %251 = vmatprep.subr.mxu0 0.0
    %252 = vmatpush1.msra.mxu0 %v224
    %253 = vmatprep.subr.mxu0 0.0
    %254 = vmatpush1.msra.mxu0 %v223
    %255 = vmatprep.subr.mxu0 0.0
    %256 = vmatpush1.msra.mxu0 %v222
    %257 = vmatprep.subr.mxu0 0.0
    %258 = vmatpush1.msra.mxu0 %v221
    %259 = vmatprep.subr.mxu0 0.0
    %260 = vmatpush1.msra.mxu0 %v220
    %261 = vmatprep.subr.mxu0 0.0
    %262 = vmatpush1.msra.mxu0 %v219
    %263 = vmatprep.subr.mxu0 0.0
    %264 = vmatpush2.msra.mxu0 0.0
    %265 = vmatprep.subr.mxu0 0.0
    %266 = vmatpush2.msra.mxu0 0.0
    %267 = vmatprep.subr.mxu0 0.0
    %268 = vmatpush2.msra.mxu0 0.0
    %269 = vmatprep.subr.mxu0 0.0
    %270 = vmatpush2.msra.mxu0 0.0
    %271 = vmatprep.subr.mxu0 0.0
    %272 = vmatpush2.msra.mxu0 0.0
    %273 = vmatprep.subr.mxu0 0.0
    %274 = vmatpush2.msra.mxu0 0.0
    %275 = vmatprep.subr.mxu0 0.0
    %276 = vmatpush2.msra.mxu0 0.0
    %277 = vmatprep.subr.mxu0 0.0
    %278 = vmatpush2.msra.mxu0 0.0
    %279 = vmatprep.subr.mxu0 0.0
    %280 = vmatpush2.msra.mxu0 0.0
    %281 = vmatprep.subr.mxu0 0.0
    %282 = vmatpush2.msra.mxu0 0.0
    %283 = vmatprep.subr.mxu0 0.0
    %284 = vmatpush2.msra.mxu0 0.0
    %285 = vmatprep.subr.mxu0 0.0
    %286 = vmatpush2.msra.mxu0 0.0
    %287 = vmatprep.subr.mxu0 0.0
    %288 = vmatpush2.msra.mxu0 0.0
    %289 = vmatprep.subr.mxu0 0.0
    %290 = vmatpush2.msra.mxu0 0.0
    %291 = vmatprep.subr.mxu0 0.0
    %292 = vmatpush2.msra.mxu0 0.0
    %293 = vmatprep.subr.mxu0 0.0
    %294 = vmatpush2.msra.mxu0 0.0
    %295 = vmatprep.mubr.f32.mxu0 0.0
    %296 = vmatmul.mubr.f32.gmra.mxu0 %v229
    %v297 = vpop.f32.mrf.mxu0
    %v298 = vadd.f32 %v227, %v297
    %v299 = vpop.f32.mrf.mxu0
    %300 = vdwg.mxu0
    %vm301 = vcmp.ge.f32.partialorder %v298, 0.0
    %v302 = vsel %vm301, 1, 0
    %v303 = vcvt.s32.f32 %v302
    %v304 = vld [vmem:[#allocation2] sm:$0xff]
    %v305 = vld [vmem:[#allocation2 + $0x8] sm:$0xff]
    %v306 = vld [vmem:[#allocation2 + $0x10] sm:$0xff]
    %v307 = vld [vmem:[#allocation2 + $0x18] sm:$0xf]
    %vm308 = vcmask 228352
    %v310 = vsel %vm308, %v303, 0
    %vm312 = vcmask 1043456
    %v314 = vsel %vm312, %v307, 0
    %316 = vmatprep.subr.mxu0 0.0
    %317 = vmatpush1.msra.mxu0 0.0
    %318 = vmatprep.subr.mxu0 0.0
    %319 = vmatpush1.msra.mxu0 0.0
    %320 = vmatprep.subr.mxu0 0.0
    %321 = vmatpush1.msra.mxu0 0.0
    %322 = vmatprep.subr.mxu0 0.0
    %323 = vmatpush1.msra.mxu0 0.0
    %324 = vmatprep.subr.mxu0 0.0
    %325 = vmatpush1.msra.mxu0 0.0
    %326 = vmatprep.subr.mxu0 0.0
    %327 = vmatpush1.msra.mxu0 0.0
    %328 = vmatprep.subr.mxu0 0.0
    %329 = vmatpush1.msra.mxu0 0.0
    %330 = vmatprep.subr.mxu0 0.0
    %331 = vmatpush1.msra.mxu0 0.0
    %332 = vmatprep.subr.mxu0 0.0
    %333 = vmatpush1.msra.mxu0 0.0
    %334 = vmatprep.subr.mxu0 0.0
    %335 = vmatpush1.msra.mxu0 0.0
    %336 = vmatprep.subr.mxu0 0.0
    %337 = vmatpush1.msra.mxu0 0.0
    %338 = vmatprep.subr.mxu0 0.0
    %339 = vmatpush1.msra.mxu0 0.0
    %340 = vmatprep.subr.mxu0 0.0
    %341 = vmatpush1.msra.mxu0 %v314
    %342 = vmatprep.subr.mxu0 0.0
    %343 = vmatpush1.msra.mxu0 %v306
    %344 = vmatprep.subr.mxu0 0.0
    %345 = vmatpush1.msra.mxu0 %v305
    %346 = vmatprep.subr.mxu0 0.0
    %347 = vmatpush1.msra.mxu0 %v304
    %348 = vmatprep.subr.mxu0 0.0
    %349 = vmatpush2.msra.mxu0 0.0
    %350 = vmatprep.subr.mxu0 0.0
    %351 = vmatpush2.msra.mxu0 0.0
    %352 = vmatprep.subr.mxu0 0.0
    %353 = vmatpush2.msra.mxu0 0.0
    %354 = vmatprep.subr.mxu0 0.0
    %355 = vmatpush2.msra.mxu0 0.0
    %356 = vmatprep.subr.mxu0 0.0
    %357 = vmatpush2.msra.mxu0 0.0
    %358 = vmatprep.subr.mxu0 0.0
    %359 = vmatpush2.msra.mxu0 0.0
    %360 = vmatprep.subr.mxu0 0.0
    %361 = vmatpush2.msra.mxu0 0.0
    %362 = vmatprep.subr.mxu0 0.0
    %363 = vmatpush2.msra.mxu0 0.0
    %364 = vmatprep.subr.mxu0 0.0
    %365 = vmatpush2.msra.mxu0 0.0
    %366 = vmatprep.subr.mxu0 0.0
    %367 = vmatpush2.msra.mxu0 0.0
    %368 = vmatprep.subr.mxu0 0.0
    %369 = vmatpush2.msra.mxu0 0.0
    %370 = vmatprep.subr.mxu0 0.0
    %371 = vmatpush2.msra.mxu0 0.0
    %372 = vmatprep.subr.mxu0 0.0
    %373 = vmatpush2.msra.mxu0 0.0
    %374 = vmatprep.subr.mxu0 0.0
    %375 = vmatpush2.msra.mxu0 0.0
    %376 = vmatprep.subr.mxu0 0.0
    %377 = vmatpush2.msra.mxu0 0.0
    %378 = vmatprep.subr.mxu0 0.0
    %379 = vmatpush2.msra.mxu0 0.0
    %380 = vmatprep.mubr.f32.mxu0 0.0
    %381 = vmatmul.mubr.f32.gmra.mxu0 %v310
    %v382 = vpop.f32.mrf.mxu0
    %v383 = vadd.f32 0.0, %v382
    %v384 = vpop.f32.mrf.mxu0
    %385 = vdwg.mxu0
    %386 = vst [vmem:[%s6] sm:$0xff] %v383
    // Predicated region
    $region30: #{decoder_forward.1} parent=1 // pred_check
      _
    $region31: #{decoder_forward.1} parent=1 // pred_check_branch
      %388 = sbr.rel (0) target = $region33
    $region32: #{decoder_forward.1} parent=1 // pred_region
      _
    $region33: #{decoder_forward.1} parent=1 // pred_fallthru
      _
    // Predicated region
    $region34: #{decoder_forward.1} parent=1 // pred_check
      _
    $region35: #{decoder_forward.1} parent=1 // pred_check_branch
      %390 = sbr.rel (0) target = $region37
    $region36: #{decoder_forward.1} parent=1 // pred_region
      _
    $region37: #{decoder_forward.1} parent=1 // pred_fallthru
      _
    %391 = vsyncpa [#allocation3], 1

</llo_original>
